<compile_context>
chip_gen: v7x
topology: tpu7x:2x2x1
jax: 0.10.0
libtpu: 0.0.40
codegen_flags: <defaults>
</compile_context>

<pallas_src>
import jax
import jax.numpy as jnp
from jax.experimental import pallas as pl
from jax.experimental.pallas import tpu as pltpu


# ----------------------------- Pallas kernels -----------------------------

def _conv3x3_band_kernel(x_ref, wb_ref, b_ref, o_ref, xp_ref):
    """3x3 'same' conv for one image, flat-NHWC layout, halo built in-kernel.

    x_ref : (H, W*C)        un-padded activation, (W, C) flattened to lanes
    wb_ref: (3, W*C, W*Co)  block-Toeplitz weights, one matrix per kh tap
    b_ref : (1, W*Co)       bias tiled over W
    o_ref : (H, W*Co)       flat-NHWC output
    xp_ref: (H+2, W*C)      VMEM scratch holding [0-row ; x ; 0-row]
    """
    H = o_ref.shape[0]
    zero_row = jnp.zeros((1, xp_ref.shape[1]), xp_ref.dtype)
    # Build the H halo in VMEM (no host-side pad / extra HBM traffic).
    xp_ref[0:1, :] = zero_row
    xp_ref[H + 1:H + 2, :] = zero_row
    xp_ref[1:H + 1, :] = x_ref[...]
    xp = xp_ref[...]
    # im2col fused as three banded matmuls: tap kh reads rows h+kh-1.
    acc = jnp.dot(xp[0:H, :], wb_ref[0], preferred_element_type=jnp.float32)
    acc = acc + jnp.dot(xp[1:H + 1, :], wb_ref[1], preferred_element_type=jnp.float32)
    acc = acc + jnp.dot(xp[2:H + 2, :], wb_ref[2], preferred_element_type=jnp.float32)
    o_ref[...] = (acc + b_ref[...]).astype(o_ref.dtype)


def _add_kernel(a_ref, b_ref, o_ref):
    o_ref[...] = a_ref[...] + b_ref[...]


def pallas_add(a, b):
    """Lane-dense elementwise add: flatten to (rows, 128) and tile over rows."""
    assert a.shape == b.shape and a.dtype == b.dtype
    LANE, SUB = 128, 8
    n = a.size
    rows = pl.cdiv(n, LANE * SUB) * SUB          # multiple of 8 sublanes
    blk = min(rows, 512)                         # 512*128*4B = 256 KiB per buffer
    rows = pl.cdiv(rows, blk) * blk              # whole number of row blocks
    pad = rows * LANE - n
    fa = jnp.pad(a.reshape(-1), (0, pad)).reshape(rows, LANE)
    fb = jnp.pad(b.reshape(-1), (0, pad)).reshape(rows, LANE)
    out = pl.pallas_call(
        _add_kernel,
        out_shape=jax.ShapeDtypeStruct((rows, LANE), a.dtype),
        grid=(rows // blk,),
        in_specs=[pl.BlockSpec((blk, LANE), lambda i: (i, 0)),
                  pl.BlockSpec((blk, LANE), lambda i: (i, 0))],
        out_specs=pl.BlockSpec((blk, LANE), lambda i: (i, 0)),
        compiler_params=pltpu.CompilerParams(
            dimension_semantics=("parallel",)),
    )(fa, fb)
    return out.reshape(-1)[:n].reshape(a.shape)


# ----------------------------- Wrapped modules -----------------------------

class PallasConv2d3x3:
    """Equivalent of nn.Conv2d(cin, cout, 3, padding=1).

    Operates on flat-NHWC activations of shape (B, H, W*cin) and returns
    (B, H, W*cout), so consecutive nodes need zero layout glue.
    """

    def __init__(self, key, cin, cout, dtype=jnp.float32):
        kw_, kb_ = jax.random.split(key)
        fan_in = cin * 9
        bound = 1.0 / float(fan_in) ** 0.5
        # deterministic synthetic init (PyTorch-default-like uniform bounds)
        self.weight = jax.random.uniform(kw_, (cout, cin, 3, 3), dtype, -bound, bound)
        self.bias = jax.random.uniform(kb_, (cout,), dtype, -bound, bound)
        self.cin, self.cout = cin, cout
        self._band_cache = {}

    def _banded_weight(self, W):
        # Block-Toeplitz weights for the W direction (zero-padded boundary
        # folded into the matrix):
        #   band[kh, wi*C + c, w*Co + co] = weight[co, c, kh, wi - w + 1]
        #                                   if 0 <= wi - w + 1 <= 2 else 0.
        # This lets the kernel do the whole im2col as three plain 2-D MXU
        # matmuls on the unmodified activation (no 9x patch tensor in HBM).
        if W in self._band_cache:
            return self._band_cache[W]
        C, Co = self.cin, self.cout
        w4 = jnp.transpose(self.weight, (2, 3, 1, 0))            # (kh, kw, C, Co)
        wi = jnp.arange(W)[:, None]
        wo = jnp.arange(W)[None, :]
        kw = wi - wo + 1                                         # (W, W)
        valid = (kw >= 0) & (kw <= 2)
        t = w4[:, jnp.clip(kw, 0, 2), :, :]                      # (3, W, W, C, Co)
        t = jnp.where(valid[None, :, :, None, None], t, 0.0)
        band = jnp.transpose(t, (0, 1, 3, 2, 4)).reshape(3, W * C, W * Co)
        band = band.astype(self.weight.dtype)
        self._band_cache[W] = band
        return band

    def __call__(self, x_flat):
        B, H, WC = x_flat.shape
        C, Co = self.cin, self.cout
        assert WC % C == 0
        W = WC // C
        WCo = W * Co
        wband = self._banded_weight(W)
        btile = jnp.tile(self.bias, W).reshape(1, WCo)
        return pl.pallas_call(
            _conv3x3_band_kernel,
            out_shape=jax.ShapeDtypeStruct((B, H, WCo), x_flat.dtype),
            grid=(B,),
            in_specs=[
                pl.BlockSpec((None, H, WC), lambda b: (b, 0, 0)),
                pl.BlockSpec((3, WC, WCo), lambda b: (0, 0, 0)),   # grid-resident
                pl.BlockSpec((1, WCo), lambda b: (0, 0)),          # grid-resident
            ],
            out_specs=pl.BlockSpec((None, H, WCo), lambda b: (b, 0, 0)),
            scratch_shapes=[pltpu.VMEM((H + 2, WC), x_flat.dtype)],
            compiler_params=pltpu.CompilerParams(
                dimension_semantics=("parallel",)),                # 2 TCs on v7x
        )(x_flat, wband, btile)


class AddMerge:
    """Merge module: element-wise sum of its two inputs (Pallas kernel)."""

    def __call__(self, a, b):
        return pallas_add(a, b)


# ------------------------------- Node (port) -------------------------------

class Node:
    """Faithful port of the forward-pass semantics of reversible2.graph.Node."""

    def __init__(self, prev, module):
        if prev is not None and not hasattr(prev, '__len__'):
            prev = [prev]
        self.prev = prev
        self.next = []
        if self.prev is not None:
            for p in self.prev:
                p.register_next(self)
        self.module = module
        self.cur_out = None
        self.cur_in = None

    def register_next(self, next_module):
        self.next.append(next_module)

    def forward(self, x):
        out = self._forward(x)
        self.remove_cur_out()
        return out

    def _forward(self, x):
        if self.cur_out is None:
            if self.prev is not None:
                xs = [p._forward(x) for p in self.prev]
            else:
                xs = [x]
            x = self.module(*xs)
            self.cur_out = x
        return self.cur_out

    def remove_cur_out(self):
        if self.prev is not None:
            for p in self.prev:
                p.remove_cur_out()
        self.cur_out = None

    # TODO(synk): `invert` / `data_init` paths depend on reversible2.invert()
    # (module inversion) and host-side in-place weight rescaling; not part of
    # the forward hot path and not reproduced here.


# ------------------------------ Reference (JAX) -----------------------------

def ref_conv(x_nchw, weight, bias):
    out = jax.lax.conv_general_dilated(
        x_nchw, weight, window_strides=(1, 1), padding='SAME',
        dimension_numbers=('NCHW', 'OIHW', 'NCHW'))
    return out + bias.reshape(1, -1, 1, 1)


# ---------------------------------- main ------------------------------------

if __name__ == "__main__":
    key = jax.random.PRNGKey(0)
    kx, k0, ka, kb = jax.random.split(key, 4)

    B, C, H, W = 2, 4, 16, 16
    x = jax.random.normal(kx, (B, C, H, W), jnp.float32)   # NCHW (PyTorch API)

    conv0 = PallasConv2d3x3(k0, C, C)
    conva = PallasConv2d3x3(ka, C, C)
    convb = PallasConv2d3x3(kb, C, C)

    n0 = Node(None, conv0)
    na = Node(n0, conva)
    nb = Node(n0, convb)
    nm = Node([na, nb], AddMerge())
    Co = conva.cout

    def run_graph(x_nchw):
        # layout conversion only at the boundary; the graph runs flat-NHWC
        xf = jnp.transpose(x_nchw, (0, 2, 3, 1)).reshape(B, H, W * C)
        yf = nm.forward(xf)
        return jnp.transpose(yf.reshape(B, H, W, Co), (0, 3, 1, 2))

    y = jax.block_until_ready(jax.jit(run_graph)(x))

    # pure-JAX reference of the same DAG
    y0 = ref_conv(x, conv0.weight, conv0.bias)
    y_ref = (ref_conv(y0, conva.weight, conva.bias)
             + ref_conv(y0, convb.weight, convb.bias))

    assert y.shape == (B, C, H, W)
    err = float(jnp.max(jnp.abs(y - y_ref)))
    assert jnp.allclose(y, y_ref, atol=1e-4, rtol=1e-4), err

    print("KERNEL_OK")
</pallas_src>

<mosaic_0001>
module attributes {stable_mosaic.version = 11 : i64} {
  func.func @_conv3x3_band_kernel(%arg0: i32, %arg1: memref<1x16x64xf32, #tpu.memory_space<vmem>>, %arg2: memref<3x64x64xf32, #tpu.memory_space<vmem>>, %arg3: memref<1x64xf32, #tpu.memory_space<vmem>>, %arg4: memref<1x16x64xf32, #tpu.memory_space<vmem>>, %arg5: memref<18x64xf32, #tpu.memory_space<vmem>>) attributes {dimension_semantics = [#tpu.dimension_semantics<parallel>], iteration_bounds = array<i64: 2>, scalar_prefetch = 0 : i64, scratch_operands = 1 : i64, tpu.core_type = #tpu.core_type<tc>, window_params = [{transform_indices = @transform_0, window_bounds = array<i64: 1, 16, 64>}, {pipeline_mode = #tpu.pipeline_mode<synchronous>, transform_indices = @transform_1, window_bounds = array<i64: 3, 64, 64>}, {pipeline_mode = #tpu.pipeline_mode<synchronous>, transform_indices = @transform_2, window_bounds = array<i64: 1, 64>}, {transform_indices = @transform_3, window_bounds = array<i64: 1, 16, 64>}]} {
    %cst = arith.constant 0.000000e+00 : f32
    %0 = vector.broadcast %cst : f32 to vector<1x64xf32>
    %c0 = arith.constant 0 : index
    %c0_0 = arith.constant 0 : index
    %1 = vector.load %arg5[%c0, %c0_0] : memref<18x64xf32, #tpu.memory_space<vmem>>, vector<1x64xf32>
    tpu.vector_store %arg5[%c0, %c0_0], %0 {strides = array<i32>} : memref<18x64xf32, #tpu.memory_space<vmem>>, vector<1x64xf32>,
    %c17 = arith.constant 17 : index
    %c0_1 = arith.constant 0 : index
    %2 = vector.load %arg5[%c17, %c0_1] : memref<18x64xf32, #tpu.memory_space<vmem>>, vector<1x64xf32>
    tpu.vector_store %arg5[%c17, %c0_1], %0 {strides = array<i32>} : memref<18x64xf32, #tpu.memory_space<vmem>>, vector<1x64xf32>,
    %c0_2 = arith.constant 0 : index
    %c0_3 = arith.constant 0 : index
    %c0_4 = arith.constant 0 : index
    %3 = vector.load %arg1[%c0_2, %c0_3, %c0_4] : memref<1x16x64xf32, #tpu.memory_space<vmem>>, vector<1x16x64xf32>
    %4 = vector.shape_cast %3 : vector<1x16x64xf32> to vector<16x64xf32>
    %c1 = arith.constant 1 : index
    %c0_5 = arith.constant 0 : index
    %5 = vector.load %arg5[%c1, %c0_5] : memref<18x64xf32, #tpu.memory_space<vmem>>, vector<16x64xf32>
    tpu.vector_store %arg5[%c1, %c0_5], %4 {strides = array<i32>} : memref<18x64xf32, #tpu.memory_space<vmem>>, vector<16x64xf32>,
    %c0_6 = arith.constant 0 : index
    %c0_7 = arith.constant 0 : index
    %6 = vector.load %arg5[%c0_6, %c0_7] : memref<18x64xf32, #tpu.memory_space<vmem>>, vector<18x64xf32>
    %7 = vector.extract_strided_slice %6 {offsets = [0, 0], sizes = [16, 64], strides = [1, 1]} : vector<18x64xf32> to vector<16x64xf32>
    %c0_8 = arith.constant 0 : index
    %c0_9 = arith.constant 0 : index
    %c0_10 = arith.constant 0 : index
    %8 = vector.load %arg2[%c0_8, %c0_9, %c0_10] : memref<3x64x64xf32, #tpu.memory_space<vmem>>, vector<1x64x64xf32>
    %9 = vector.shape_cast %8 : vector<1x64x64xf32> to vector<64x64xf32>
    %cst_11 = arith.constant dense<0.000000e+00> : vector<16x64xf32>
    %10 = tpu.matmul %7, %9, %cst_11 {dimension_numbers = #tpu.dot_dimension_numbers<[1], [0], [0], [1], [0, 0, 1, 1], [], []>} : vector<16x64xf32>, vector<64x64xf32>, vector<16x64xf32> -> vector<16x64xf32>
    %11 = vector.extract_strided_slice %6 {offsets = [1, 0], sizes = [16, 64], strides = [1, 1]} : vector<18x64xf32> to vector<16x64xf32>
    %c1_12 = arith.constant 1 : index
    %c0_13 = arith.constant 0 : index
    %c0_14 = arith.constant 0 : index
    %12 = vector.load %arg2[%c1_12, %c0_13, %c0_14] : memref<3x64x64xf32, #tpu.memory_space<vmem>>, vector<1x64x64xf32>
    %13 = vector.shape_cast %12 : vector<1x64x64xf32> to vector<64x64xf32>
    %cst_15 = arith.constant dense<0.000000e+00> : vector<16x64xf32>
    %14 = tpu.matmul %11, %13, %cst_15 {dimension_numbers = #tpu.dot_dimension_numbers<[1], [0], [0], [1], [0, 0, 1, 1], [], []>} : vector<16x64xf32>, vector<64x64xf32>, vector<16x64xf32> -> vector<16x64xf32>
    %15 = arith.addf %10, %14 : vector<16x64xf32>
    %16 = vector.extract_strided_slice %6 {offsets = [2, 0], sizes = [16, 64], strides = [1, 1]} : vector<18x64xf32> to vector<16x64xf32>
    %c2 = arith.constant 2 : index
    %c0_16 = arith.constant 0 : index
    %c0_17 = arith.constant 0 : index
    %17 = vector.load %arg2[%c2, %c0_16, %c0_17] : memref<3x64x64xf32, #tpu.memory_space<vmem>>, vector<1x64x64xf32>
    %18 = vector.shape_cast %17 : vector<1x64x64xf32> to vector<64x64xf32>
    %cst_18 = arith.constant dense<0.000000e+00> : vector<16x64xf32>
    %19 = tpu.matmul %16, %18, %cst_18 {dimension_numbers = #tpu.dot_dimension_numbers<[1], [0], [0], [1], [0, 0, 1, 1], [], []>} : vector<16x64xf32>, vector<64x64xf32>, vector<16x64xf32> -> vector<16x64xf32>
    %20 = arith.addf %15, %19 : vector<16x64xf32>
    %c0_19 = arith.constant 0 : index
    %c0_20 = arith.constant 0 : index
    %21 = vector.load %arg3[%c0_19, %c0_20] : memref<1x64xf32, #tpu.memory_space<vmem>>, vector<1x64xf32>
    %22 = vector.broadcast %21 : vector<1x64xf32> to vector<16x64xf32>
    %23 = arith.addf %20, %22 : vector<16x64xf32>
    %c0_21 = arith.constant 0 : index
    %c0_22 = arith.constant 0 : index
    %c0_23 = arith.constant 0 : index
    %24 = vector.load %arg4[%c0_21, %c0_22, %c0_23] : memref<1x16x64xf32, #tpu.memory_space<vmem>>, vector<1x16x64xf32>
    %25 = vector.shape_cast %24 : vector<1x16x64xf32> to vector<16x64xf32>
    %26 = vector.shape_cast %23 : vector<16x64xf32> to vector<1x16x64xf32>
    tpu.vector_store %arg4[%c0_21, %c0_22, %c0_23], %26 {strides = array<i32>} : memref<1x16x64xf32, #tpu.memory_space<vmem>>, vector<1x16x64xf32>,
    return
  }
  func.func @transform_0(%arg0: i32) -> (i32, i32, i32) {
    %c0_i32 = arith.constant 0 : i32
    %c0_i32_0 = arith.constant 0 : i32
    %c0_i32_1 = arith.constant 0 : i32
    return %arg0, %c0_i32, %c0_i32_0 : i32, i32, i32
  }
  func.func @transform_1(%arg0: i32) -> (i32, i32, i32) {
    %c0_i32 = arith.constant 0 : i32
    %c0_i32_0 = arith.constant 0 : i32
    %c0_i32_1 = arith.constant 0 : i32
    %c0_i32_2 = arith.constant 0 : i32
    return %c0_i32, %c0_i32_0, %c0_i32_1 : i32, i32, i32
  }
  func.func @transform_2(%arg0: i32) -> (i32, i32) {
    %c0_i32 = arith.constant 0 : i32
    %c0_i32_0 = arith.constant 0 : i32
    %c0_i32_1 = arith.constant 0 : i32
    return %c0_i32, %c0_i32_0 : i32, i32
  }
  func.func @transform_3(%arg0: i32) -> (i32, i32, i32) {
    %c0_i32 = arith.constant 0 : i32
    %c0_i32_0 = arith.constant 0 : i32
    %c0_i32_1 = arith.constant 0 : i32
    return %arg0, %c0_i32, %c0_i32_0 : i32, i32, i32
  }
}

module attributes {stable_mosaic.version = 11 : i64} {
  func.func @_add_kernel(%arg0: i32, %arg1: memref<16x128xf32, #tpu.memory_space<vmem>>, %arg2: memref<16x128xf32, #tpu.memory_space<vmem>>, %arg3: memref<16x128xf32, #tpu.memory_space<vmem>>) attributes {dimension_semantics = [#tpu.dimension_semantics<parallel>], iteration_bounds = array<i64: 1>, scalar_prefetch = 0 : i64, scratch_operands = 0 : i64, tpu.core_type = #tpu.core_type<tc>, window_params = [{transform_indices = @transform_0, window_bounds = array<i64: 16, 128>}, {transform_indices = @transform_1, window_bounds = array<i64: 16, 128>}, {transform_indices = @transform_2, window_bounds = array<i64: 16, 128>}]} {
    %c0 = arith.constant 0 : index
    %c0_0 = arith.constant 0 : index
    %0 = vector.load %arg1[%c0, %c0_0] : memref<16x128xf32, #tpu.memory_space<vmem>>, vector<16x128xf32>
    %c0_1 = arith.constant 0 : index
    %c0_2 = arith.constant 0 : index
    %1 = vector.load %arg2[%c0_1, %c0_2] : memref<16x128xf32, #tpu.memory_space<vmem>>, vector<16x128xf32>
    %2 = arith.addf %0, %1 : vector<16x128xf32>
    %c0_3 = arith.constant 0 : index
    %c0_4 = arith.constant 0 : index
    %3 = vector.load %arg3[%c0_3, %c0_4] : memref<16x128xf32, #tpu.memory_space<vmem>>, vector<16x128xf32>
    tpu.vector_store %arg3[%c0_3, %c0_4], %2 {strides = array<i32>} : memref<16x128xf32, #tpu.memory_space<vmem>>, vector<16x128xf32>,
    return
  }
  func.func @transform_0(%arg0: i32) -> (i32, i32) {
    %c0_i32 = arith.constant 0 : i32
    %c0_i32_0 = arith.constant 0 : i32
    return %arg0, %c0_i32 : i32, i32
  }
  func.func @transform_1(%arg0: i32) -> (i32, i32) {
    %c0_i32 = arith.constant 0 : i32
    %c0_i32_0 = arith.constant 0 : i32
    return %arg0, %c0_i32 : i32, i32
  }
  func.func @transform_2(%arg0: i32) -> (i32, i32) {
    %c0_i32 = arith.constant 0 : i32
    %c0_i32_0 = arith.constant 0 : i32
    return %arg0, %c0_i32 : i32, i32
  }
}

</mosaic_0001>

<llo_original>
// kernel: tile.14
$region0: #{tile.14}
  #allocation0 [shape = 's32[1]{0}', space=sflag, size = 0x4, scoped, tag = 'scoped memory for tile.14']
  %s0 = inlined_call_operand.vmem [shape: f32[4], index: 0, kind: input, shape index: {}]
  %s1 = inlined_call_operand.vmem [shape: f32[16,4], index: 1, kind: output, shape index: {}]
  // Predicated region
  $region2: #{tile.14} parent=0 // pred_check
    _
  $region3: #{tile.14} parent=0 // pred_check_branch
    %3 = sbr.rel (0) target = $region5
  $region4: #{tile.14} parent=0 // pred_region
    _
  $region5: #{tile.14} parent=0 // pred_fallthru
    _
  %v4 = vld [vmem:[%s0] ss:$0 sm:$0xff]
  %5 = vst [vmem:[%s1] sm:$0xff] %v4
  %s6 = scalar_lea.vmem %s1, 8
  %7 = vst [vmem:[%s6] sm:$0xff] %v4

// kernel: tile.15
$region0: #{tile.15}
  %s0 = inlined_call_operand.vmem [shape: f32[16,4], index: 0, kind: input, shape index: {}]
  %s1 = inlined_call_operand.vmem [shape: f32[1,64], index: 1, kind: output, shape index: {}]
  $region1: #{tile.15} parent=0
    #allocation0 [shape = 'u8[4096]{0}', space=vmem, size = 0x1000, scoped, tag = 'scoped mem for output reshape']
    %v2 = vld [vmem:[%s0] sm:$0x1]
    %vm3 = vcmask 31744
    %4 = vst.msk [vmem:[#allocation0] sm:$0x1] %vm3, %v2
    %s5 = scalar_lea.vmem %s0, 15
    %v6 = vld [vmem:[%s5] sm:$0x1]
    %7 = vrot.lane.b32.xlu0 %v6, 60
    %v8 = vpop.permute.xlu0 %7
    %vm9 = vcmask 523744
    %10 = vst.msk [vmem:[#allocation0] sm:$0x1] %vm9, %v8
    %s11 = scalar_lea.vmem %s0, 14
    %v12 = vld [vmem:[%s11] sm:$0x1]
    %13 = vrot.lane.b32.xlu0 %v12, 56
    %v14 = vpop.permute.xlu0 %13
    %vm15 = vcmask 490944
    %16 = vst.msk [vmem:[#allocation0] sm:$0x1] %vm15, %v14
    %s17 = scalar_lea.vmem %s0, 13
    %v18 = vld [vmem:[%s17] sm:$0x1]
    %19 = vrot.lane.b32.xlu0 %v18, 52
    %v20 = vpop.permute.xlu0 %19
    %vm21 = vcmask 458144
    %22 = vst.msk [vmem:[#allocation0] sm:$0x1] %vm21, %v20
    %s23 = scalar_lea.vmem %s0, 12
    %v24 = vld [vmem:[%s23] sm:$0x1]
    %25 = vrot.lane.b32.xlu0 %v24, 48
    %v26 = vpop.permute.xlu0 %25
    %vm27 = vcmask 425344
    %28 = vst.msk [vmem:[#allocation0] sm:$0x1] %vm27, %v26
    %s29 = scalar_lea.vmem %s0, 11
    %v30 = vld [vmem:[%s29] sm:$0x1]
    %31 = vrot.lane.b32.xlu0 %v30, 44
    %v32 = vpop.permute.xlu0 %31
    %vm33 = vcmask 392544
    %34 = vst.msk [vmem:[#allocation0] sm:$0x1] %vm33, %v32
    %s35 = scalar_lea.vmem %s0, 10
    %v36 = vld [vmem:[%s35] sm:$0x1]
    %37 = vrot.lane.b32.xlu0 %v36, 40
    %v38 = vpop.permute.xlu0 %37
    %vm39 = vcmask 359744
    %40 = vst.msk [vmem:[#allocation0] sm:$0x1] %vm39, %v38
    %s41 = scalar_lea.vmem %s0, 9
    %v42 = vld [vmem:[%s41] sm:$0x1]
    %43 = vrot.lane.b32.xlu0 %v42, 36
    %v44 = vpop.permute.xlu0 %43
    %vm45 = vcmask 326944
    %46 = vst.msk [vmem:[#allocation0] sm:$0x1] %vm45, %v44
    %s47 = scalar_lea.vmem %s0, 8
    %v48 = vld [vmem:[%s47] sm:$0x1]
    %49 = vrot.lane.b32.xlu0 %v48, 32
    %v50 = vpop.permute.xlu0 %49
    %vm51 = vcmask 294144
    %52 = vst.msk [vmem:[#allocation0] sm:$0x1] %vm51, %v50
    %s53 = scalar_lea.vmem %s0, 7
    %v54 = vld [vmem:[%s53] sm:$0x1]
    %55 = vrot.lane.b32.xlu0 %v54, 28
    %v56 = vpop.permute.xlu0 %55
    %vm57 = vcmask 261344
    %58 = vst.msk [vmem:[#allocation0] sm:$0x1] %vm57, %v56
    %s59 = scalar_lea.vmem %s0, 6
    %v60 = vld [vmem:[%s59] sm:$0x1]
    %61 = vrot.lane.b32.xlu0 %v60, 24
    %v62 = vpop.permute.xlu0 %61
    %vm63 = vcmask 228544
    %64 = vst.msk [vmem:[#allocation0] sm:$0x1] %vm63, %v62
    %s65 = scalar_lea.vmem %s0, 5
    %v66 = vld [vmem:[%s65] sm:$0x1]
    %67 = vrot.lane.b32.xlu0 %v66, 20
    %v68 = vpop.permute.xlu0 %67
    %vm69 = vcmask 195744
    %70 = vst.msk [vmem:[#allocation0] sm:$0x1] %vm69, %v68
    %s71 = scalar_lea.vmem %s0, 4
    %v72 = vld [vmem:[%s71] sm:$0x1]
    %73 = vrot.lane.b32.xlu0 %v72, 16
    %v74 = vpop.permute.xlu0 %73
    %vm75 = vcmask 162944
    %76 = vst.msk [vmem:[#allocation0] sm:$0x1] %vm75, %v74
    %s77 = scalar_lea.vmem %s0, 3
    %v78 = vld [vmem:[%s77] sm:$0x1]
    %79 = vrot.lane.b32.xlu0 %v78, 12
    %v80 = vpop.permute.xlu0 %79
    %vm81 = vcmask 130144
    %82 = vst.msk [vmem:[#allocation0] sm:$0x1] %vm81, %v80
    %s83 = scalar_lea.vmem %s0, 2
    %v84 = vld [vmem:[%s83] sm:$0x1]
    %85 = vrot.lane.b32.xlu0 %v84, 8
    %v86 = vpop.permute.xlu0 %85
    %vm87 = vcmask 97344
    %88 = vst.msk [vmem:[#allocation0] sm:$0x1] %vm87, %v86
    %s89 = scalar_lea.vmem %s0, 1
    %v90 = vld [vmem:[%s89] sm:$0x1]
    %91 = vrot.lane.b32.xlu0 %v90, 4
    %v92 = vpop.permute.xlu0 %91
    %vm93 = vcmask 64544
    %94 = vst.msk [vmem:[#allocation0] sm:$0x1] %vm93, %v92
    %s96 = sshllo.u32 0, 1
    %v98 = vld [vmem:[#allocation0] sm:%s96]
    %s99 = sshllo.u32 0, 1
    %100 = vst [vmem:[%s1] sm:%s99] %v98

// kernel: run_graph.4
$region0: #{run_graph.4}
  #allocation0 [shape = 'u32[]', space=smem, size = 0x4, offset = 0x4, fixed_abs, tag = 'smem constant byte address 0x4 - core index']
  #allocation1 [shape = 'u32[144,128]{1,0:T(1,128)}', space=vmem, size = 0x12000, scoped, tag = 'internal scratch']
  #allocation2 [shape = 'f32[18,64]{1,0:T(8,128)}', space=vmem, size = 0x3000, scoped, tag = 'scratch operand']
  %s0 = inlined_call_operand.vmem [shape: f32[2,16,64], index: 0, kind: input, shape index: {}]
  %s1 = inlined_call_operand.vmem [shape: f32[3,64,64], index: 1, kind: input, shape index: {}]
  %s2 = inlined_call_operand.vmem [shape: f32[1,64], index: 2, kind: input, shape index: {}]
  %s3 = inlined_call_operand.vmem [shape: f32[2,16,64], index: 3, kind: output, shape index: {}]
  %s4 = sld [smem:[#allocation0]]
  $region45: #{run_graph.4} parent=0
    _
  %s6 = ssub.s32 1, %s4
  %s7 = scalar_select 0, %s6, %s4
  loop: start=0, step=1, limit=4
  $region2: #{run_graph.4} parent=0 // loop_pre_header
    _
  $region3: #{run_graph.4} parent=0 // loop_header
    %s9 = sphi 0, %s13
    %p10 = scmp.ge.s32.totalorder %s9, 4
    %s19 = sphi 0, %s21
    %s22 = sphi 0, %s19
    %s23 = sphi 0, %s22
    %s39 = sphi 0, %s23
    %s43 = sphi 0, %s43
    %s45 = sphi 0, %s43
    %s46 = sphi 0, %s45
    %s60 = sphi 0, %s46
    %s64 = sphi 0, %s64
    %s66 = sphi 0, %s64
    %s67 = sphi 0, %s66
    %s81 = sphi 0, %s67
    %s87 = sphi 0, %s89
    %s90 = sphi 0, %s87
    %s91 = sphi 0, %s90
    %s107 = sphi 0, %s91
  $region4: #{run_graph.4} parent=0 // loop_header_branch
    %12 = sbr.rel (%p10) target = $region8
  $region5: #{run_graph.4} parent=0 // loop_body
    %s14 = ssub.s32 %s9, 1
    %s15 = ssub.s32 %s9, 2
    %s16 = sadd.s32 %s9, 1
    %s17 = ssub.s32 %s9, %s16
    %p18 = scmp.eq.s32.totalorder %s17, 0
    %s20 = sadd.s32 %s19, 1
    %s21 = scalar_select %p18, %s19, %s20
    %p24 = pneg %p18
    %p25 = scmp.eq.s32.totalorder %s9, 1
    %p26 = por %p24, %p25
    %p27 = scmp.ne.s32.totalorder %s19, %s22
    %p28 = scmp.eq.s32.totalorder %s9, 0
    %p29 = por %p27, %p28
    %p30 = scmp.ne.s32.totalorder %s19, %s22
    %p31 = scmp.eq.s32.totalorder %s14, 1
    %p32 = por %p30, %p31
    %p33 = scmp.ne.s32.totalorder %s22, %s23
    %p34 = scmp.eq.s32.totalorder %s14, 0
    %p35 = por %p33, %p34
    %p36 = scmp.ne.s32.totalorder %s22, %s23
    %p37 = scmp.eq.s32.totalorder %s15, 1
    %p38 = por %p36, %p37
    %p40 = scmp.ne.s32.totalorder %s23, %s39
    %p41 = scmp.eq.s32.totalorder %s15, 0
    %p42 = por %p40, %p41
    %s44 = sadd.s32 %s43, 1
    %p47 = scmp.eq.s32.totalorder %s9, 1
    %p48 = scmp.ne.s32.totalorder %s43, %s45
    %p49 = scmp.eq.s32.totalorder %s9, 0
    %p50 = por %p48, %p49
    %p51 = scmp.ne.s32.totalorder %s43, %s45
    %p52 = scmp.eq.s32.totalorder %s14, 1
    %p53 = por %p51, %p52
    %p54 = scmp.ne.s32.totalorder %s45, %s46
    %p55 = scmp.eq.s32.totalorder %s14, 0
    %p56 = por %p54, %p55
    %p57 = scmp.ne.s32.totalorder %s45, %s46
    %p58 = scmp.eq.s32.totalorder %s15, 1
    %p59 = por %p57, %p58
    %p61 = scmp.ne.s32.totalorder %s46, %s60
    %p62 = scmp.eq.s32.totalorder %s15, 0
    %p63 = por %p61, %p62
    %s65 = sadd.s32 %s64, 1
    %p68 = scmp.eq.s32.totalorder %s9, 1
    %p69 = scmp.ne.s32.totalorder %s64, %s66
    %p70 = scmp.eq.s32.totalorder %s9, 0
    %p71 = por %p69, %p70
    %p72 = scmp.ne.s32.totalorder %s64, %s66
    %p73 = scmp.eq.s32.totalorder %s14, 1
    %p74 = por %p72, %p73
    %p75 = scmp.ne.s32.totalorder %s66, %s67
    %p76 = scmp.eq.s32.totalorder %s14, 0
    %p77 = por %p75, %p76
    %p78 = scmp.ne.s32.totalorder %s66, %s67
    %p79 = scmp.eq.s32.totalorder %s15, 1
    %p80 = por %p78, %p79
    %p82 = scmp.ne.s32.totalorder %s67, %s81
    %p83 = scmp.eq.s32.totalorder %s15, 0
    %p84 = por %p82, %p83
    %s85 = ssub.s32 %s9, %s16
    %p86 = scmp.eq.s32.totalorder %s85, 0
    %s88 = sadd.s32 %s87, 1
    %s89 = scalar_select %p86, %s87, %s88
    %p92 = pneg %p86
    %p93 = scmp.eq.s32.totalorder %s9, 1
    %p94 = por %p92, %p93
    %p95 = scmp.ne.s32.totalorder %s87, %s90
    %p96 = scmp.eq.s32.totalorder %s9, 0
    %p97 = por %p95, %p96
    %p98 = scmp.ne.s32.totalorder %s87, %s90
    %p99 = scmp.eq.s32.totalorder %s14, 1
    %p100 = por %p98, %p99
    %p101 = scmp.ne.s32.totalorder %s90, %s91
    %p102 = scmp.eq.s32.totalorder %s14, 0
    %p103 = por %p101, %p102
    %p104 = scmp.ne.s32.totalorder %s90, %s91
    %p105 = scmp.eq.s32.totalorder %s15, 1
    %p106 = por %p104, %p105
    %p108 = scmp.ne.s32.totalorder %s91, %s107
    %p109 = scmp.eq.s32.totalorder %s15, 0
    %p110 = por %p108, %p109
    %p111 = scmp.le.s32.totalorder 1, %s9
    %p112 = scmp.lt.s32.totalorder %s9, 3
    %p113 = pnand %p111, %p112
    %p114 = pneg %p113
    // Predicated region
    $region9: #{run_graph.4} parent=5 // pred_check
      _
    $region10: #{run_graph.4} parent=5 // pred_check_branch
      %116 = sbr.rel (%p113) target = $region12
    $region11: #{run_graph.4} parent=5 // pred_region
      %s117 = ssub.s32 %s9, 1
      // Predicated region
      $region13: #{run_graph.4} parent=11 // pred_check
        %p118 = pneg %p56
      $region14: #{run_graph.4} parent=11 // pred_check_branch
        %120 = sbr.rel (%p118) target = $region16
      $region15: #{run_graph.4} parent=11 // pred_region
        _
      $region16: #{run_graph.4} parent=11 // pred_fallthru
        _
      // Predicated region
      $region17: #{run_graph.4} parent=11 // pred_check
        %p121 = pneg %p77
      $region18: #{run_graph.4} parent=11 // pred_check_branch
        %123 = sbr.rel (%p121) target = $region20
      $region19: #{run_graph.4} parent=11 // pred_region
        _
      $region20: #{run_graph.4} parent=11 // pred_fallthru
        _
    $region12: #{run_graph.4} parent=5 // pred_fallthru
      _
    %p124 = scmp.lt.s32.totalorder %s9, 2
    // Predicated region
    $region21: #{run_graph.4} parent=5 // pred_check
      %p125 = pneg %p124
    $region22: #{run_graph.4} parent=5 // pred_check_branch
      %127 = sbr.rel (%p125) target = $region24
    $region23: #{run_graph.4} parent=5 // pred_region
      // Predicated region
      $region25: #{run_graph.4} parent=23 // pred_check
        %p128 = pneg %p29
      $region26: #{run_graph.4} parent=23 // pred_check_branch
        %130 = sbr.rel (%p128) target = $region28
      $region27: #{run_graph.4} parent=23 // pred_region
        %p131 = scmp.lt.s32.totalorder %s9, 1
        %s132 = scalar_select %p131, %s9, 1
        %s133 = smul.addr %s132, 2
        %s134 = smul.addr %s133, 8
        %s135 = scalar_lea.vmem %s0, %s134
      $region28: #{run_graph.4} parent=23 // pred_fallthru
        _
    $region24: #{run_graph.4} parent=5 // pred_fallthru
      _
    %p136 = scmp.le.s32.totalorder 1, %s9
    %p137 = scmp.lt.s32.totalorder %s9, 3
    %p138 = pnand %p136, %p137
    %p139 = pneg %p138
    // Predicated region
    $region29: #{run_graph.4} parent=5 // pred_check
      _
    $region30: #{run_graph.4} parent=5 // pred_check_branch
      %141 = sbr.rel (%p138) target = $region32
    $region31: #{run_graph.4} parent=5 // pred_region
      %s142 = ssub.s32 %s9, 1
      %p143 = scmp.lt.s32.totalorder %s14, 1
      %s144 = scalar_select %p143, %s14, 1
      %s145 = smul.addr %s144, 2
      %s146 = smul.addr %s145, 8
      %s147 = scalar_lea.vmem %s0, %s146
      %p148 = pneg %p35
      %p149 = pneg %p32
      %p150 = pneg %p56
      %p151 = pneg %p53
      %p152 = pneg %p77
      %p153 = pneg %p74
      %p154 = pneg %p103
      %p155 = pneg %p100
      %p156 = scmp.lt.s32.totalorder %s14, 1
      %s157 = scalar_select %p156, %s14, 1
      %s158 = smul.addr %s157, 2
      %s159 = smul.addr %s158, 8
      %s160 = scalar_lea.vmem %s3, %s159
      %p161 = scmp.lt.s32.totalorder %s14, 1
      %s162 = scalar_select %p161, %s14, 1
      %s163 = smul.addr %s162, 2
      %s164 = smul.addr %s163, 8
      %s165 = scalar_lea.vmem %s0, %s164
      %p166 = scmp.lt.s32.totalorder %s14, 1
      %s167 = scalar_select %p166, %s14, 1
      %s168 = smul.addr %s167, 2
      %s169 = smul.addr %s168, 8
      %s170 = scalar_lea.vmem %s3, %s169
      %vm171 = vcmask 516096
      %172 = vst.msk [vmem:[#allocation2] sm:$0x1] %vm171, 0.0
      %173 = vst.msk [vmem:[#allocation2 + $0x11] sm:$0x1] %vm171, 0.0
      %v174 = vld [vmem:[%s165] sm:$0xff]
      %v175 = vld [vmem:[%s165 + $0x8] sm:$0xff]
      %vm176 = vcmask 523264
      %177 = vst.msk [vmem:[#allocation2 + $0x1] sm:$0xff] %vm176, %v174
      %178 = vst.msk [vmem:[#allocation2 + $0x9] sm:$0xff] %vm176, %v175
      %v179 = vld [vmem:[#allocation2] sm:$0xff]
      %v180 = vld [vmem:[#allocation2 + $0x8] sm:$0xff]
      %v181 = vld [vmem:[#allocation2 + $0x10] sm:$0x3]
      %v182 = vld [vmem:[%s1] sm:$0xff]
      %v183 = vld [vmem:[%s1 + $0x8] sm:$0xff]
      %v184 = vld [vmem:[%s1 + $0x10] sm:$0xff]
      %v185 = vld [vmem:[%s1 + $0x18] sm:$0xff]
      %v186 = vld [vmem:[%s1 + $0x20] sm:$0xff]
      %v187 = vld [vmem:[%s1 + $0x28] sm:$0xff]
      %v188 = vld [vmem:[%s1 + $0x30] sm:$0xff]
      %v189 = vld [vmem:[%s1 + $0x38] sm:$0xff]
      %s190 = scalar_lea.vmem %s1, 64
      %v191 = vld [vmem:[%s190] sm:$0xff]
      %v192 = vld [vmem:[%s190 + $0x8] sm:$0xff]
      %v193 = vld [vmem:[%s190 + $0x10] sm:$0xff]
      %v194 = vld [vmem:[%s190 + $0x18] sm:$0xff]
      %v195 = vld [vmem:[%s190 + $0x20] sm:$0xff]
      %v196 = vld [vmem:[%s190 + $0x28] sm:$0xff]
      %v197 = vld [vmem:[%s190 + $0x30] sm:$0xff]
      %v198 = vld [vmem:[%s190 + $0x38] sm:$0xff]
      %vm202 = vcmask 1046528
      %v203 = vrot.slane %v179, 1
      %v204 = vrot.slane %v180, 1
      %v205 = vsel %vm202, %v203, %v204
      %v206 = vrot.slane %v181, 1
      %v207 = vsel %vm202, %v204, %v206
      %v208 = vsel %vm176, %v205, 0
      %v210 = vsel %vm176, %v207, 0
      %212 = vmatprep.subr.mxu0 0.0
      %213 = vmatpush1.msra.mxu0 %v191
      %214 = vmatprep.subr.mxu0 0.0
      %215 = vmatpush1.msra.mxu0 %v192
      %216 = vmatprep.subr.mxu0 0.0
      %217 = vmatpush1.msra.mxu0 %v193
      %218 = vmatprep.subr.mxu0 0.0
      %219 = vmatpush1.msra.mxu0 %v194
      %220 = vmatprep.subr.mxu0 0.0
      %221 = vmatpush1.msra.mxu0 %v195
      %222 = vmatprep.subr.mxu0 0.0
      %223 = vmatpush1.msra.mxu0 %v196
      %224 = vmatprep.subr.mxu0 0.0
      %225 = vmatpush1.msra.mxu0 %v197
      %226 = vmatprep.subr.mxu0 0.0
      %227 = vmatpush1.msra.mxu0 %v198
      %228 = vmatprep.subr.mxu0 0.0
      %229 = vmatpush1.msra.mxu0 0.0
      %230 = vmatprep.subr.mxu0 0.0
      %231 = vmatpush1.msra.mxu0 0.0
      %232 = vmatprep.subr.mxu0 0.0
      %233 = vmatpush1.msra.mxu0 0.0
      %234 = vmatprep.subr.mxu0 0.0
      %235 = vmatpush1.msra.mxu0 0.0
      %236 = vmatprep.subr.mxu0 0.0
      %237 = vmatpush1.msra.mxu0 0.0
      %238 = vmatprep.subr.mxu0 0.0
      %239 = vmatpush1.msra.mxu0 0.0
      %240 = vmatprep.subr.mxu0 0.0
      %241 = vmatpush1.msra.mxu0 0.0
      %242 = vmatprep.subr.mxu0 0.0
      %243 = vmatpush1.msra.mxu0 0.0
      %244 = vmatprep.subr.mxu0 0.0
      %245 = vmatpush1.msra.mxu0 0.0
      %246 = vmatprep.subr.mxu0 0.0
      %247 = vmatpush1.msra.mxu0 0.0
      %248 = vmatprep.subr.mxu0 0.0
      %249 = vmatpush1.msra.mxu0 0.0
      %250 = vmatprep.subr.mxu0 0.0
      %251 = vmatpush1.msra.mxu0 0.0
      %252 = vmatprep.subr.mxu0 0.0
      %253 = vmatpush1.msra.mxu0 0.0
      %254 = vmatprep.subr.mxu0 0.0
      %255 = vmatpush1.msra.mxu0 0.0
      %256 = vmatprep.subr.mxu0 0.0
      %257 = vmatpush1.msra.mxu0 0.0
      %258 = vmatprep.subr.mxu0 0.0
      %259 = vmatpush1.msra.mxu0 0.0
      %260 = vmatprep.subr.mxu0 0.0
      %261 = vmatpush1.msra.mxu0 0.0
      %262 = vmatprep.subr.mxu0 0.0
      %263 = vmatpush1.msra.mxu0 0.0
      %264 = vmatprep.subr.mxu0 0.0
      %265 = vmatpush1.msra.mxu0 0.0
      %266 = vmatprep.subr.mxu0 0.0
      %267 = vmatpush1.msra.mxu0 0.0
      %268 = vmatprep.subr.mxu0 0.0
      %269 = vmatpush1.msra.mxu0 0.0
      %270 = vmatprep.subr.mxu0 0.0
      %271 = vmatpush1.msra.mxu0 0.0
      %272 = vmatprep.subr.mxu0 0.0
      %273 = vmatpush1.msra.mxu0 0.0
      %274 = vmatprep.subr.mxu0 0.0
      %275 = vmatpush1.msra.mxu0 0.0
      %276 = vmatprep.mubr.f32.mxu0 0.0
      %277 = vmatmul.mubr.f32.gmra.mrb[0].mxu0 %v208
      %v278 = vpop.f32.mrb[0].mxu0
      %v279 = vadd.f32 0.0, %v278
      %v280 = vpop.f32.mrb[0].mxu0
      %281 = vmatprep.mubr.f32.mxu0 0.0
      %282 = vmatmul.mubr.f32.gmra.mrb[0].mxu0 %v210
      %v283 = vpop.f32.mrb[0].mxu0
      %v284 = vadd.f32 0.0, %v283
      %v285 = vpop.f32.mrb[0].mxu0
      %286 = vdwg.mxu0
      %v287 = vsel %vm176, %v179, 0
      %v289 = vsel %vm176, %v180, 0
      %291 = vmatprep.subr.mxu0 0.0
      %292 = vmatpush1.msra.mxu0 %v182
      %293 = vmatprep.subr.mxu0 0.0
      %294 = vmatpush1.msra.mxu0 %v183
      %295 = vmatprep.subr.mxu0 0.0
      %296 = vmatpush1.msra.mxu0 %v184
      %297 = vmatprep.subr.mxu0 0.0
      %298 = vmatpush1.msra.mxu0 %v185
      %299 = vmatprep.subr.mxu0 0.0
      %300 = vmatpush1.msra.mxu0 %v186
      %301 = vmatprep.subr.mxu0 0.0
      %302 = vmatpush1.msra.mxu0 %v187
      %303 = vmatprep.subr.mxu0 0.0
      %304 = vmatpush1.msra.mxu0 %v188
      %305 = vmatprep.subr.mxu0 0.0
      %306 = vmatpush1.msra.mxu0 %v189
      %307 = vmatprep.subr.mxu0 0.0
      %308 = vmatpush1.msra.mxu0 0.0
      %309 = vmatprep.subr.mxu0 0.0
      %310 = vmatpush1.msra.mxu0 0.0
      %311 = vmatprep.subr.mxu0 0.0
      %312 = vmatpush1.msra.mxu0 0.0
      %313 = vmatprep.subr.mxu0 0.0
      %314 = vmatpush1.msra.mxu0 0.0
      %315 = vmatprep.subr.mxu0 0.0
      %316 = vmatpush1.msra.mxu0 0.0
      %317 = vmatprep.subr.mxu0 0.0
      %318 = vmatpush1.msra.mxu0 0.0
      %319 = vmatprep.subr.mxu0 0.0
      %320 = vmatpush1.msra.mxu0 0.0
      %321 = vmatprep.subr.mxu0 0.0
      %322 = vmatpush1.msra.mxu0 0.0
      %323 = vmatprep.subr.mxu0 0.0
      %324 = vmatpush1.msra.mxu0 0.0
      %325 = vmatprep.subr.mxu0 0.0
      %326 = vmatpush1.msra.mxu0 0.0
      %327 = vmatprep.subr.mxu0 0.0
      %328 = vmatpush1.msra.mxu0 0.0
      %329 = vmatprep.subr.mxu0 0.0
      %330 = vmatpush1.msra.mxu0 0.0
      %331 = vmatprep.subr.mxu0 0.0
      %332 = vmatpush1.msra.mxu0 0.0
      %333 = vmatprep.subr.mxu0 0.0
      %334 = vmatpush1.msra.mxu0 0.0
      %335 = vmatprep.subr.mxu0 0.0
      %336 = vmatpush1.msra.mxu0 0.0
      %337 = vmatprep.subr.mxu0 0.0
      %338 = vmatpush1.msra.mxu0 0.0
      %339 = vmatprep.subr.mxu0 0.0
      %340 = vmatpush1.msra.mxu0 0.0
      %341 = vmatprep.subr.mxu0 0.0
      %342 = vmatpush1.msra.mxu0 0.0
      %343 = vmatprep.subr.mxu0 0.0
      %344 = vmatpush1.msra.mxu0 0.0
      %345 = vmatprep.subr.mxu0 0.0
      %346 = vmatpush1.msra.mxu0 0.0
      %347 = vmatprep.subr.mxu0 0.0
      %348 = vmatpush1.msra.mxu0 0.0
      %349 = vmatprep.subr.mxu0 0.0
      %350 = vmatpush1.msra.mxu0 0.0
      %351 = vmatprep.subr.mxu0 0.0
      %352 = vmatpush1.msra.mxu0 0.0
      %353 = vmatprep.subr.mxu0 0.0
      %354 = vmatpush1.msra.mxu0 0.0
      %355 = vmatprep.mubr.f32.mxu0 0.0
      %356 = vmatmul.mubr.f32.gmra.mrb[0].mxu0 %v287
      %v357 = vpop.f32.mrb[0].mxu0
      %v358 = vadd.f32 %v279, %v357
      %v359 = vpop.f32.mrb[0].mxu0
      %360 = vmatprep.mubr.f32.mxu0 0.0
      %361 = vmatmul.mubr.f32.gmra.mrb[0].mxu0 %v289
      %v362 = vpop.f32.mrb[0].mxu0
      %v363 = vadd.f32 %v284, %v362
      %v364 = vpop.f32.mrb[0].mxu0
      %365 = vdwg.mxu0
      %s366 = scalar_lea.vmem %s1, 128
      %v367 = vld [vmem:[%s366] sm:$0xff]
      %v368 = vld [vmem:[%s366 + $0x8] sm:$0xff]
      %v369 = vld [vmem:[%s366 + $0x10] sm:$0xff]
      %v370 = vld [vmem:[%s366 + $0x18] sm:$0xff]
      %v371 = vld [vmem:[%s366 + $0x20] sm:$0xff]
      %v372 = vld [vmem:[%s366 + $0x28] sm:$0xff]
      %v373 = vld [vmem:[%s366 + $0x30] sm:$0xff]
      %v374 = vld [vmem:[%s366 + $0x38] sm:$0xff]
      %vm375 = vcmask 1045504
      %v376 = vrot.slane %v179, 2
      %v377 = vrot.slane %v180, 2
      %v378 = vsel %vm375, %v376, %v377
      %v379 = vrot.slane %v181, 2
      %v380 = vsel %vm375, %v377, %v379
      %v381 = vsel %vm176, %v378, 0
      %v383 = vsel %vm176, %v380, 0
      %385 = vmatprep.subr.mxu0 0.0
      %386 = vmatpush1.msra.mxu0 %v367
      %387 = vmatprep.subr.mxu0 0.0
      %388 = vmatpush1.msra.mxu0 %v368
      %389 = vmatprep.subr.mxu0 0.0
      %390 = vmatpush1.msra.mxu0 %v369
      %391 = vmatprep.subr.mxu0 0.0
      %392 = vmatpush1.msra.mxu0 %v370
      %393 = vmatprep.subr.mxu0 0.0
      %394 = vmatpush1.msra.mxu0 %v371
      %395 = vmatprep.subr.mxu0 0.0
      %396 = vmatpush1.msra.mxu0 %v372
      %397 = vmatprep.subr.mxu0 0.0
      %398 = vmatpush1.msra.mxu0 %v373
      %399 = vmatprep.subr.mxu0 0.0
      %400 = vmatpush1.msra.mxu0 %v374
      %401 = vmatprep.subr.mxu0 0.0
      %402 = vmatpush1.msra.mxu0 0.0
      %403 = vmatprep.subr.mxu0 0.0
      %404 = vmatpush1.msra.mxu0 0.0
      %405 = vmatprep.subr.mxu0 0.0
      %406 = vmatpush1.msra.mxu0 0.0
      %407 = vmatprep.subr.mxu0 0.0
      %408 = vmatpush1.msra.mxu0 0.0
      %409 = vmatprep.subr.mxu0 0.0
      %410 = vmatpush1.msra.mxu0 0.0
      %411 = vmatprep.subr.mxu0 0.0
      %412 = vmatpush1.msra.mxu0 0.0
      %413 = vmatprep.subr.mxu0 0.0
      %414 = vmatpush1.msra.mxu0 0.0
      %415 = vmatprep.subr.mxu0 0.0
      %416 = vmatpush1.msra.mxu0 0.0
      %417 = vmatprep.subr.mxu0 0.0
      %418 = vmatpush1.msra.mxu0 0.0
      %419 = vmatprep.subr.mxu0 0.0
      %420 = vmatpush1.msra.mxu0 0.0
      %421 = vmatprep.subr.mxu0 0.0
      %422 = vmatpush1.msra.mxu0 0.0
      %423 = vmatprep.subr.mxu0 0.0
      %424 = vmatpush1.msra.mxu0 0.0
      %425 = vmatprep.subr.mxu0 0.0
      %426 = vmatpush1.msra.mxu0 0.0
      %427 = vmatprep.subr.mxu0 0.0
      %428 = vmatpush1.msra.mxu0 0.0
      %429 = vmatprep.subr.mxu0 0.0
      %430 = vmatpush1.msra.mxu0 0.0
      %431 = vmatprep.subr.mxu0 0.0
      %432 = vmatpush1.msra.mxu0 0.0
      %433 = vmatprep.subr.mxu0 0.0
      %434 = vmatpush1.msra.mxu0 0.0
      %435 = vmatprep.subr.mxu0 0.0
      %436 = vmatpush1.msra.mxu0 0.0
      %437 = vmatprep.subr.mxu0 0.0
      %438 = vmatpush1.msra.mxu0 0.0
      %439 = vmatprep.subr.mxu0 0.0
      %440 = vmatpush1.msra.mxu0 0.0
      %441 = vmatprep.subr.mxu0 0.0
      %442 = vmatpush1.msra.mxu0 0.0
      %443 = vmatprep.subr.mxu0 0.0
      %444 = vmatpush1.msra.mxu0 0.0
      %445 = vmatprep.subr.mxu0 0.0
      %446 = vmatpush1.msra.mxu0 0.0
      %447 = vmatprep.subr.mxu0 0.0
      %448 = vmatpush1.msra.mxu0 0.0
      %449 = vmatprep.mubr.f32.mxu0 0.0
      %450 = vmatmul.mubr.f32.gmra.mrb[0].mxu0 %v381
      %v451 = vpop.f32.mrb[0].mxu0
      %v452 = vadd.f32 0.0, %v451
      %v453 = vpop.f32.mrb[0].mxu0
      %454 = vmatprep.mubr.f32.mxu0 0.0
      %455 = vmatmul.mubr.f32.gmra.mrb[0].mxu0 %v383
      %v456 = vpop.f32.mrb[0].mxu0
      %v457 = vadd.f32 0.0, %v456
      %v458 = vpop.f32.mrb[0].mxu0
      %459 = vdwg.mxu0
      %v460 = vadd.f32 %v358, %v452
      %v461 = vadd.f32 %v363, %v457
      %v462 = vld [vmem:[%s2] sm:$0x1]
      %v464 = vlaneseq
      %v465 = vshrl.u32 %v464, 7
      %v466 = vsub.s32 0, %v465
      %v467 = vrot.slane %v462, %v466
      %v469 = vadd.f32 %v460, %v467
      %v470 = vadd.f32 %v461, %v467
      %471 = vst.msk [vmem:[%s170] sm:$0xff] %vm176, %v469
      %472 = vst.msk [vmem:[%s170 + $0x8] sm:$0xff] %vm176, %v470
      %p473 = scmp.lt.s32.totalorder %s14, 1
      %s474 = scalar_select %p473, %s14, 1
      %s475 = smul.addr %s474, 2
      %s476 = smul.addr %s475, 8
      %s477 = scalar_lea.vmem %s3, %s476
      // Predicated region
      $region33: #{run_graph.4} parent=31 // pred_check
        %p478 = pneg %p100
      $region34: #{run_graph.4} parent=31 // pred_check_branch
        %480 = sbr.rel (%p478) target = $region36
      $region35: #{run_graph.4} parent=31 // pred_region
        _
      $region36: #{run_graph.4} parent=31 // pred_fallthru
        _
    $region32: #{run_graph.4} parent=5 // pred_fallthru
      _
    %p481 = scmp.le.s32.totalorder 2, %s9
    // Predicated region
    $region37: #{run_graph.4} parent=5 // pred_check
      %p482 = pneg %p481
    $region38: #{run_graph.4} parent=5 // pred_check_branch
      %484 = sbr.rel (%p482) target = $region40
    $region39: #{run_graph.4} parent=5 // pred_region
      %s485 = ssub.s32 %s9, 2
      // Predicated region
      $region41: #{run_graph.4} parent=39 // pred_check
        %p486 = pneg %p106
      $region42: #{run_graph.4} parent=39 // pred_check_branch
        %488 = sbr.rel (%p486) target = $region44
      $region43: #{run_graph.4} parent=39 // pred_region
        %p489 = scmp.lt.s32.totalorder %s15, 1
        %s490 = scalar_select %p489, %s15, 1
        %s491 = smul.addr %s490, 2
        %s492 = smul.addr %s491, 8
        %s493 = scalar_lea.vmem %s3, %s492
      $region44: #{run_graph.4} parent=39 // pred_fallthru
        _
    $region40: #{run_graph.4} parent=5 // pred_fallthru
      _
  $region6: #{run_graph.4} parent=0 // loop_footer
    %s13 = sadd.s32 1, %s9
  $region7: #{run_graph.4} parent=0 // loop_footer_branch
    %8 = sbr.rel target = $region3
  $region8: #{run_graph.4} parent=0 // loop_exit
    _

// kernel: run_graph.7
$region0: #{run_graph.7}
  #allocation0 [shape = 'u32[]', space=smem, size = 0x4, offset = 0x4, fixed_abs, tag = 'smem constant byte address 0x4 - core index']
  #allocation1 [shape = 'u32[144,128]{1,0:T(1,128)}', space=vmem, size = 0x12000, scoped, tag = 'internal scratch']
  %s0 = inlined_call_operand.vmem [shape: f32[16,128], index: 0, kind: input, shape index: {}]
  %s1 = inlined_call_operand.vmem [shape: f32[16,128], index: 1, kind: input, shape index: {}]
  %s2 = inlined_call_operand.vmem [shape: f32[16,128], index: 2, kind: output, shape index: {}]
  %s3 = sld [smem:[#allocation0]]
  $region18: #{run_graph.7} parent=0
    _
  %s5 = ssub.s32 1, %s3
  %s6 = scalar_select 0, %s5, %s3
  // Predicated region
  $region2: #{run_graph.7} parent=0 // pred_check
    _
  $region3: #{run_graph.7} parent=0 // pred_check_branch
    %8 = sbr.rel (0) target = $region5
  $region4: #{run_graph.7} parent=0 // pred_region
    _
  $region5: #{run_graph.7} parent=0 // pred_fallthru
    _
  // Predicated region
  $region6: #{run_graph.7} parent=0 // pred_check
    _
  $region7: #{run_graph.7} parent=0 // pred_check_branch
    %10 = sbr.rel (0) target = $region9
  $region8: #{run_graph.7} parent=0 // pred_region
    _
  $region9: #{run_graph.7} parent=0 // pred_fallthru
    _
  %v11 = vld [vmem:[%s0] sm:$0xff]
  %v12 = vld [vmem:[%s0 + $0x8] sm:$0xff]
  %v13 = vld [vmem:[%s1] sm:$0xff]
  %v14 = vld [vmem:[%s1 + $0x8] sm:$0xff]
  %v15 = vadd.f32 %v11, %v13
  %v16 = vadd.f32 %v12, %v14
  %17 = vst [vmem:[%s2] sm:$0xff] %v15
  %18 = vst [vmem:[%s2 + $0x8] sm:$0xff] %v16
  // Predicated region
  $region10: #{run_graph.7} parent=0 // pred_check
    _
  $region11: #{run_graph.7} parent=0 // pred_check_branch
    %20 = sbr.rel (0) target = $region13
  $region12: #{run_graph.7} parent=0 // pred_region
    _
  $region13: #{run_graph.7} parent=0 // pred_fallthru
    _
  // Predicated region
  $region14: #{run_graph.7} parent=0 // pred_check
    _
  $region15: #{run_graph.7} parent=0 // pred_check_branch
    %22 = sbr.rel (0) target = $region17
  $region16: #{run_graph.7} parent=0 // pred_region
    _
  $region17: #{run_graph.7} parent=0 // pred_fallthru
    _

</llo_original>
